<compile_context>
chip_gen: v5e
topology: v5e:2x2
jax: 0.10.0
libtpu: 0.0.40
codegen_flags: <defaults>
</compile_context>

<pallas_src>
import functools

import jax
import jax.numpy as jnp
import numpy as np
from jax.experimental import pallas as pl
from jax.experimental.pallas import tpu as pltpu


# ---------------------------------------------------------------------------
# Fused Pallas kernel: the whole MaskedFullyConnection stack in one body.
#   refs = (x, w0_t, w1_t, ..., w{n-1}_t, bias_all, out)
# Weights are pre-masked, pre-transposed (in_f, out_f); the last layer's
# columns (and its bias row) are additionally pre-permuted so the flat output
# is already cpd-major / code-minor.  Activations and accumulation are f32;
# weights may be stored bf16 and are upcast in VMEM.
# ---------------------------------------------------------------------------
def _fused_estimator_kernel(*refs, out_features, negative_slope):
    n_layers = len(out_features)
    x_ref = refs[0]
    w_refs = refs[1:1 + n_layers]
    b_ref = refs[1 + n_layers]
    out_ref = refs[2 + n_layers]

    b_all = b_ref[...]                         # (n_layers, max_out_f) f32
    h = x_ref[...].astype(jnp.float32)         # (tile_m, in_f0)
    for i in range(n_layers):
        wt = w_refs[i][...].astype(jnp.float32)        # (in_f, out_f)
        h = jnp.dot(h, wt, preferred_element_type=jnp.float32)
        h = h + b_all[i, :out_features[i]]
        if i < n_layers - 1:
            # LeakyReLU(0.01): max(h, 0.01*h) == where(h > 0, h, 0.01*h)
            # for any slope in (0, 1).
            h = jnp.maximum(h, negative_slope * h)
    out_ref[...] = h.astype(out_ref.dtype)


def fused_estimator_pallas(x_flat, weights_t, bias_all, *, tile_m=None):
    """x_flat: (B, in_f0) -> flat (B, out_f_last) f32 (already cpd-major)."""
    B, in_f0 = x_flat.shape
    out_features = tuple(int(w.shape[1]) for w in weights_t)
    out_f = out_features[-1]

    # Batch row-tiling: weights/biases have constant index_maps along the grid
    # (DMA'd once, VMEM-resident); batch tiles stream through in "parallel".
    if tile_m is None:
        tile_m = B if B <= 256 else 256
    b_pad = ((B + tile_m - 1) // tile_m) * tile_m
    if b_pad != B:
        x_flat = jnp.pad(x_flat, ((0, b_pad - B), (0, 0)))
    grid_m = b_pad // tile_m

    operands = [x_flat]
    in_specs = [pl.BlockSpec((tile_m, in_f0), lambda i: (i, 0))]
    for wt in weights_t:
        operands.append(wt)
        in_specs.append(pl.BlockSpec(wt.shape, lambda i: (0, 0)))
    operands.append(bias_all)
    in_specs.append(pl.BlockSpec(bias_all.shape, lambda i: (0, 0)))

    flops = 2 * b_pad * sum(int(w.shape[0]) * int(w.shape[1])
                            for w in weights_t)
    bytes_accessed = int(
        x_flat.size * x_flat.dtype.itemsize
        + sum(int(w.size) * w.dtype.itemsize for w in weights_t)
        + bias_all.size * bias_all.dtype.itemsize
        + b_pad * out_f * 4)

    out = pl.pallas_call(
        functools.partial(_fused_estimator_kernel,
                          out_features=out_features,
                          negative_slope=0.01),
        out_shape=jax.ShapeDtypeStruct((b_pad, out_f), jnp.float32),
        grid=(grid_m,),
        in_specs=in_specs,
        out_specs=pl.BlockSpec((tile_m, out_f), lambda i: (i, 0)),
        compiler_params=pltpu.CompilerParams(
            dimension_semantics=("parallel",)),
        cost_estimate=pl.CostEstimate(flops=flops,
                                      bytes_accessed=bytes_accessed,
                                      transcendentals=0),
    )(*operands)

    if b_pad != B:
        out = out[:B]
    return out


# ---------------------------------------------------------------------------
# Autoregressive mask (Eq. 6 of the LSA paper), identical to the PyTorch code.
# ---------------------------------------------------------------------------
def build_mask(mask_type, in_ch, out_ch, code_length):
    out_f, in_f = out_ch * code_length, in_ch * code_length
    mask = np.zeros((out_f, in_f), dtype=np.float32)
    for f in range(0 if mask_type == "B" else 1, out_f // out_ch):
        sr, er = f * out_ch, (f + 1) * out_ch
        ec = f * in_ch if mask_type == "A" else (f + 1) * in_ch
        if ec != 0:
            mask[sr:er, 0:ec] = 1.0
    return jnp.asarray(mask)


# ---------------------------------------------------------------------------
# Parameter construction (deterministic, PyTorch-Linear-style uniform init).
# ---------------------------------------------------------------------------
def init_estimator1d_params(key, code_length, fm_list, cpd_channels):
    layer_dims = []
    mask_type, fm_in = "A", 1
    for fm_out in fm_list:
        layer_dims.append((mask_type, fm_in, fm_out))
        mask_type, fm_in = "B", fm_out
    layer_dims.append((mask_type, fm_in, cpd_channels))

    params = []
    for (mt, c_in, c_out) in layer_dims:
        in_f, out_f = c_in * code_length, c_out * code_length
        key, kw, kb = jax.random.split(key, 3)
        bound = 1.0 / np.sqrt(in_f)
        w = jax.random.uniform(kw, (out_f, in_f), jnp.float32, -bound, bound)
        b = jax.random.uniform(kb, (out_f,), jnp.float32, -bound, bound)
        mask = build_mask(mt, c_in, c_out, code_length)
        params.append((w, mask, b))
    return params


def prepare_estimator_weights(raw_params, code_length, cpd_channels,
                              param_dtype=jnp.bfloat16):
    """Kernel-ready parameters.

    * (w * mask).T precomputed once (masked + transposed).
    * Last layer's output columns / bias entries permuted from PyTorch flat
      order (f*cpd + c) to (c*L + f) so the kernel output reshapes directly
      into (B, cpd_channels, code_length) -- no post-kernel transpose.
    * Biases packed into one zero-padded (n_layers, max_out_f) f32 operand.
    * Weights stored in `param_dtype` (default bf16); zeros from the mask are
      exactly representable, and activations stay f32 in the kernel.
    """
    n_layers = len(raw_params)
    L, C = code_length, cpd_channels
    # new flat index c*L + f  <-  old flat index f*C + c
    last_perm = np.arange(L * C).reshape(L, C).T.reshape(-1)

    max_out = max(int(w.shape[0]) for (w, _, _) in raw_params)
    bias_all = np.zeros((n_layers, max_out), np.float32)
    weights_t = []
    for idx, (w, mask, b) in enumerate(raw_params):
        wt = np.asarray(w * mask).T.copy()              # (in_f, out_f)
        bb = np.asarray(b).copy()
        if idx == n_layers - 1:
            wt = wt[:, last_perm]
            bb = bb[last_perm]
        weights_t.append(jnp.asarray(wt, dtype=param_dtype))
        bias_all[idx, :bb.shape[0]] = bb
    return tuple(weights_t), jnp.asarray(bias_all)


# ---------------------------------------------------------------------------
# Estimator1D.forward (jitted).
# ---------------------------------------------------------------------------
@functools.partial(jax.jit, static_argnames=("code_length", "cpd_channels"))
def estimator1d_forward(x, weights_t, bias_all, *, code_length, cpd_channels):
    """x: (B, code_length) f32 -> (B, cpd_channels, code_length) f32."""
    B = x.shape[0]
    # unsqueeze(1)+transpose(1,2)+view is the identity on x (first layer has a
    # single input channel); all inner transpose/view pairs of consecutive MFC
    # layers cancel; the final transpose is folded into the last layer's
    # column permutation at prepare time -> only a reshape remains here.
    o_flat = fused_estimator_pallas(x, weights_t, bias_all)
    return o_flat.reshape(B, cpd_channels, code_length)


# ---------------------------------------------------------------------------
# Faithful per-layer pure-JAX reference (keeps the PyTorch transpose/view
# dance) — validates the transpose folding and the fused kernel.
# ---------------------------------------------------------------------------
def estimator1d_reference(x, raw_params, code_length,
                          weight_dtype=jnp.float32):
    B = x.shape[0]
    h = x[:, None, :]
    n_layers = len(raw_params)
    for idx, (w, mask, b) in enumerate(raw_params):
        x_flat = jnp.transpose(h, (0, 2, 1)).reshape(B, -1)
        wm = (w * mask).astype(weight_dtype).astype(jnp.float32)
        o = jnp.dot(x_flat, wm.T, preferred_element_type=jnp.float32) + b
        if idx < n_layers - 1:
            o = jnp.where(o > 0, o, 0.01 * o)     # nn.LeakyReLU() default
        c_out = w.shape[0] // code_length
        h = jnp.transpose(o.reshape(B, code_length, c_out), (0, 2, 1))
    return h


if __name__ == "__main__":
    code_length = 16
    fm_list = [32, 32]
    cpd_channels = 8
    batch = 2

    key = jax.random.PRNGKey(0)
    key, kx, kxl = jax.random.split(key, 3)
    x = jax.random.normal(kx, (batch, code_length), jnp.float32)

    raw_params = init_estimator1d_params(key, code_length, fm_list,
                                         cpd_channels)

    # --- f32 weight path: exact check against the faithful reference -------
    w_f32, b_all_f32 = prepare_estimator_weights(
        raw_params, code_length, cpd_channels, param_dtype=jnp.float32)
    out = jax.block_until_ready(
        estimator1d_forward(x, w_f32, b_all_f32,
                            code_length=code_length,
                            cpd_channels=cpd_channels))
    assert out.shape == (batch, cpd_channels, code_length), out.shape
    ref = estimator1d_reference(x, raw_params, code_length)
    np.testing.assert_allclose(np.asarray(out), np.asarray(ref),
                               rtol=1e-5, atol=1e-5)

    # --- default bf16-weight path (half the weight DMA; f32 activations) ---
    w_bf16, b_all_bf16 = prepare_estimator_weights(
        raw_params, code_length, cpd_channels)        # default bf16
    out_bf16 = jax.block_until_ready(
        estimator1d_forward(x, w_bf16, b_all_bf16,
                            code_length=code_length,
                            cpd_channels=cpd_channels))
    ref_bf16 = estimator1d_reference(x, raw_params, code_length,
                                     weight_dtype=jnp.bfloat16)
    np.testing.assert_allclose(np.asarray(out_bf16), np.asarray(ref_bf16),
                               rtol=5e-3, atol=5e-3)

    # --- large batch: exercises the weight-resident "parallel" B-tile grid --
    big_batch = 512
    x_big = jax.random.normal(kxl, (big_batch, code_length), jnp.float32)
    out_big = jax.block_until_ready(
        estimator1d_forward(x_big, w_f32, b_all_f32,
                            code_length=code_length,
                            cpd_channels=cpd_channels))
    assert out_big.shape == (big_batch, cpd_channels, code_length)
    ref_big = estimator1d_reference(x_big, raw_params, code_length)
    np.testing.assert_allclose(np.asarray(out_big), np.asarray(ref_big),
                               rtol=1e-5, atol=1e-5)

    print("KERNEL_OK")
</pallas_src>

<mosaic_0001>
module attributes {stable_mosaic.version = 11 : i64} {
  func.func @_fused_estimator_kernel(%arg0: i32, %arg1: memref<2x16xf32, #tpu.memory_space<vmem>>, %arg2: memref<16x512xf32, #tpu.memory_space<vmem>>, %arg3: memref<512x512xf32, #tpu.memory_space<vmem>>, %arg4: memref<512x128xf32, #tpu.memory_space<vmem>>, %arg5: memref<3x512xf32, #tpu.memory_space<vmem>>, %arg6: memref<2x128xf32, #tpu.memory_space<vmem>>) attributes {dimension_semantics = [#tpu.dimension_semantics<parallel>], iteration_bounds = array<i64: 1>, scalar_prefetch = 0 : i64, scratch_operands = 0 : i64, tpu.core_type = #tpu.core_type<tc>, window_params = [{transform_indices = @transform_0, window_bounds = array<i64: 2, 16>}, {pipeline_mode = #tpu.pipeline_mode<synchronous>, transform_indices = @transform_1, window_bounds = array<i64: 16, 512>}, {pipeline_mode = #tpu.pipeline_mode<synchronous>, transform_indices = @transform_2, window_bounds = array<i64: 512, 512>}, {pipeline_mode = #tpu.pipeline_mode<synchronous>, transform_indices = @transform_3, window_bounds = array<i64: 512, 128>}, {pipeline_mode = #tpu.pipeline_mode<synchronous>, transform_indices = @transform_4, window_bounds = array<i64: 3, 512>}, {transform_indices = @transform_5, window_bounds = array<i64: 2, 128>}]} {
    %c0 = arith.constant 0 : index
    %c0_0 = arith.constant 0 : index
    %0 = vector.load %arg5[%c0, %c0_0] : memref<3x512xf32, #tpu.memory_space<vmem>>, vector<3x512xf32>
    %c0_1 = arith.constant 0 : index
    %c0_2 = arith.constant 0 : index
    %1 = vector.load %arg1[%c0_1, %c0_2] : memref<2x16xf32, #tpu.memory_space<vmem>>, vector<2x16xf32>
    %c0_3 = arith.constant 0 : index
    %c0_4 = arith.constant 0 : index
    %2 = vector.load %arg2[%c0_3, %c0_4] : memref<16x512xf32, #tpu.memory_space<vmem>>, vector<16x512xf32>
    %cst = arith.constant dense<0.000000e+00> : vector<2x512xf32>
    %3 = tpu.matmul %1, %2, %cst {dimension_numbers = #tpu.dot_dimension_numbers<[1], [0], [0], [1], [0, 0, 1, 1], [], []>} : vector<2x16xf32>, vector<16x512xf32>, vector<2x512xf32> -> vector<2x512xf32>
    %4 = vector.extract_strided_slice %0 {offsets = [0, 0], sizes = [1, 512], strides = [1, 1]} : vector<3x512xf32> to vector<1x512xf32>
    %5 = vector.shape_cast %4 : vector<1x512xf32> to vector<512xf32>
    %6 = vector.shape_cast %5 : vector<512xf32> to vector<1x512xf32>
    %7 = vector.broadcast %6 : vector<1x512xf32> to vector<2x512xf32>
    %8 = arith.addf %3, %7 : vector<2x512xf32>
    %cst_5 = arith.constant 0.00999999977 : f32
    %9 = vector.broadcast %cst_5 : f32 to vector<2x512xf32>
    %10 = arith.mulf %9, %8 : vector<2x512xf32>
    %11 = arith.maximumf %8, %10 : vector<2x512xf32>
    %c0_6 = arith.constant 0 : index
    %c0_7 = arith.constant 0 : index
    %12 = vector.load %arg3[%c0_6, %c0_7] : memref<512x512xf32, #tpu.memory_space<vmem>>, vector<512x512xf32>
    %cst_8 = arith.constant dense<0.000000e+00> : vector<2x512xf32>
    %13 = tpu.matmul %11, %12, %cst_8 {dimension_numbers = #tpu.dot_dimension_numbers<[1], [0], [0], [1], [0, 0, 1, 1], [], []>} : vector<2x512xf32>, vector<512x512xf32>, vector<2x512xf32> -> vector<2x512xf32>
    %14 = vector.extract_strided_slice %0 {offsets = [1, 0], sizes = [1, 512], strides = [1, 1]} : vector<3x512xf32> to vector<1x512xf32>
    %15 = vector.shape_cast %14 : vector<1x512xf32> to vector<512xf32>
    %16 = vector.shape_cast %15 : vector<512xf32> to vector<1x512xf32>
    %17 = vector.broadcast %16 : vector<1x512xf32> to vector<2x512xf32>
    %18 = arith.addf %13, %17 : vector<2x512xf32>
    %cst_9 = arith.constant 0.00999999977 : f32
    %19 = vector.broadcast %cst_9 : f32 to vector<2x512xf32>
    %20 = arith.mulf %19, %18 : vector<2x512xf32>
    %21 = arith.maximumf %18, %20 : vector<2x512xf32>
    %c0_10 = arith.constant 0 : index
    %c0_11 = arith.constant 0 : index
    %22 = vector.load %arg4[%c0_10, %c0_11] : memref<512x128xf32, #tpu.memory_space<vmem>>, vector<512x128xf32>
    %cst_12 = arith.constant dense<0.000000e+00> : vector<2x128xf32>
    %23 = tpu.matmul %21, %22, %cst_12 {dimension_numbers = #tpu.dot_dimension_numbers<[1], [0], [0], [1], [0, 0, 1, 1], [], []>} : vector<2x512xf32>, vector<512x128xf32>, vector<2x128xf32> -> vector<2x128xf32>
    %24 = vector.extract_strided_slice %0 {offsets = [2, 0], sizes = [1, 128], strides = [1, 1]} : vector<3x512xf32> to vector<1x128xf32>
    %25 = vector.shape_cast %24 : vector<1x128xf32> to vector<128xf32>
    %26 = vector.shape_cast %25 : vector<128xf32> to vector<1x128xf32>
    %27 = vector.broadcast %26 : vector<1x128xf32> to vector<2x128xf32>
    %28 = arith.addf %23, %27 : vector<2x128xf32>
    %c0_13 = arith.constant 0 : index
    %c0_14 = arith.constant 0 : index
    %29 = vector.load %arg6[%c0_13, %c0_14] : memref<2x128xf32, #tpu.memory_space<vmem>>, vector<2x128xf32>
    tpu.vector_store %arg6[%c0_13, %c0_14], %28 {strides = array<i32>} : memref<2x128xf32, #tpu.memory_space<vmem>>, vector<2x128xf32>,
    return
  }
  func.func @transform_0(%arg0: i32) -> (i32, i32) {
    %c0_i32 = arith.constant 0 : i32
    %c0_i32_0 = arith.constant 0 : i32
    return %arg0, %c0_i32 : i32, i32
  }
  func.func @transform_1(%arg0: i32) -> (i32, i32) {
    %c0_i32 = arith.constant 0 : i32
    %c0_i32_0 = arith.constant 0 : i32
    %c0_i32_1 = arith.constant 0 : i32
    return %c0_i32, %c0_i32_0 : i32, i32
  }
  func.func @transform_2(%arg0: i32) -> (i32, i32) {
    %c0_i32 = arith.constant 0 : i32
    %c0_i32_0 = arith.constant 0 : i32
    %c0_i32_1 = arith.constant 0 : i32
    return %c0_i32, %c0_i32_0 : i32, i32
  }
  func.func @transform_3(%arg0: i32) -> (i32, i32) {
    %c0_i32 = arith.constant 0 : i32
    %c0_i32_0 = arith.constant 0 : i32
    %c0_i32_1 = arith.constant 0 : i32
    return %c0_i32, %c0_i32_0 : i32, i32
  }
  func.func @transform_4(%arg0: i32) -> (i32, i32) {
    %c0_i32 = arith.constant 0 : i32
    %c0_i32_0 = arith.constant 0 : i32
    %c0_i32_1 = arith.constant 0 : i32
    return %c0_i32, %c0_i32_0 : i32, i32
  }
  func.func @transform_5(%arg0: i32) -> (i32, i32) {
    %c0_i32 = arith.constant 0 : i32
    %c0_i32_0 = arith.constant 0 : i32
    return %arg0, %c0_i32 : i32, i32
  }
}

</mosaic_0001>

<llo_original>
// kernel: estimator1d_forward.1
$region0: #{estimator1d_forward.1}
  #allocation0 [shape = 'u32[]', space=smem, size = 0x4, offset = 0x4, fixed_abs, tag = 'smem constant byte address 0x4 - core index']
  #allocation1 [shape = 'u32[72,128]{1,0:T(1,128)}', space=vmem, size = 0x9000, scoped, tag = 'internal scratch']
  %s0 = inlined_call_operand.hbm [shape: f32[2,16], index: 0, kind: input, shape index: {}]
  %s1 = inlined_call_operand.hbm [shape: f32[16,512], index: 1, kind: input, shape index: {}]
  %s2 = inlined_call_operand.hbm [shape: f32[512,512], index: 2, kind: input, shape index: {}]
  %s3 = inlined_call_operand.hbm [shape: f32[512,128], index: 3, kind: input, shape index: {}]
  %s4 = inlined_call_operand.hbm [shape: f32[3,512], index: 4, kind: input, shape index: {}]
  %s5 = inlined_call_operand.vmem [shape: f32[2,128], index: 5, kind: output, shape index: {}]
  %s6 = sld [smem:[#allocation0]]
  $region50: #{estimator1d_forward.1} parent=0
    _
  %s8 = ssub.s32 1, %s6
  %s9 = scalar_select 0, %s8, %s6
  $region1: #{estimator1d_forward.1} parent=0
    #allocation2 [shape = 'u8[1024]{0}', space=vmem, size = 0x400, scoped, tag = 'input window, operand 0, single buffered']
    #allocation3 [shape = 's32[1]{0}', space=sflag, size = 0x4, scoped, tag = 'scoped memory for estimator1d_forward.1']
    #allocation4 [shape = 'u8[32768]{0}', space=vmem, size = 0x8000, scoped, tag = 'input window, operand 1, single buffered']
    #allocation5 [shape = 's32[1]{0}', space=sflag, size = 0x4, scoped, tag = 'scoped memory for estimator1d_forward.1']
    #allocation6 [shape = 'u8[1048576]{0}', space=vmem, size = 0x100000, scoped, tag = 'input window, operand 2, single buffered']
    #allocation7 [shape = 'u8[262144]{0}', space=vmem, size = 0x40000, scoped, tag = 'input window, operand 3, single buffered']
    #allocation8 [shape = 's32[1]{0}', space=sflag, size = 0x4, scoped, tag = 'scoped memory for estimator1d_forward.1']
    #allocation9 [shape = 'u8[8192]{0}', space=vmem, size = 0x2000, scoped, tag = 'input window, operand 4, single buffered']
    %10 = vsyncpa [#allocation3], 0
    %11 = vsyncpa [#allocation5], 0
    %12 = vsyncpa [#allocation8], 0
    // Predicated region
    $region2: #{estimator1d_forward.1} parent=1 // pred_check
      _
    $region3: #{estimator1d_forward.1} parent=1 // pred_check_branch
      %14 = sbr.rel (0) target = $region5
    $region4: #{estimator1d_forward.1} parent=1 // pred_region
      %16 = vsyncadd [#allocation3], 0
      %s18 = sshll.u32 %s0, 4
      %s19 = int_to_ptr.hbm [resolvable:$true] %s18
      %s20 = sshll.u32 [#allocation2], 4
      %s21 = int_to_ptr.vmem [resolvable:$true] %s20
      %23 = dma.hbm_to_vmem [thread:$0]  %s19, 32, %s21, [#allocation3]
    $region5: #{estimator1d_forward.1} parent=1 // pred_fallthru
      _
    // Predicated region
    $region6: #{estimator1d_forward.1} parent=1 // pred_check
      _
    $region7: #{estimator1d_forward.1} parent=1 // pred_check_branch
      %25 = sbr.rel (0) target = $region9
    $region8: #{estimator1d_forward.1} parent=1 // pred_region
      %27 = vsyncadd [#allocation5], 0
      %s28 = sshll.u32 %s1, 4
      %s29 = int_to_ptr.hbm [resolvable:$true] %s28
      %s30 = sshll.u32 [#allocation4], 4
      %s31 = int_to_ptr.vmem [resolvable:$true] %s30
      %36 = dma.hbm_to_vmem [thread:$0]  %s29, 1024, %s31, [#allocation5], 512, 512, 32
    $region9: #{estimator1d_forward.1} parent=1 // pred_fallthru
      _
    // Predicated region
    $region10: #{estimator1d_forward.1} parent=1 // pred_check
      _
    $region11: #{estimator1d_forward.1} parent=1 // pred_check_branch
      %38 = sbr.rel (0) target = $region13
    $region12: #{estimator1d_forward.1} parent=1 // pred_region
      %40 = vsyncadd [#allocation5], 0
      %s41 = sshll.u32 %s2, 4
      %s42 = int_to_ptr.hbm [resolvable:$true] %s41
      %s43 = sshll.u32 [#allocation6], 4
      %s44 = int_to_ptr.vmem [resolvable:$true] %s43
      %49 = dma.hbm_to_vmem [thread:$0]  %s42, 32768, %s44, [#allocation5], 512, 512, 32
    $region13: #{estimator1d_forward.1} parent=1 // pred_fallthru
      _
    // Predicated region
    $region14: #{estimator1d_forward.1} parent=1 // pred_check
      _
    $region15: #{estimator1d_forward.1} parent=1 // pred_check_branch
      %51 = sbr.rel (0) target = $region17
    $region16: #{estimator1d_forward.1} parent=1 // pred_region
      %53 = vsyncadd [#allocation8], 0
      %s54 = sshll.u32 %s3, 4
      %s55 = int_to_ptr.hbm [resolvable:$true] %s54
      %s56 = sshll.u32 [#allocation7], 4
      %s57 = int_to_ptr.vmem [resolvable:$true] %s56
      %62 = dma.hbm_to_vmem [thread:$0]  %s55, 8192, %s57, [#allocation8], 128, 128, 8
    $region17: #{estimator1d_forward.1} parent=1 // pred_fallthru
      _
    // Predicated region
    $region18: #{estimator1d_forward.1} parent=1 // pred_check
      _
    $region19: #{estimator1d_forward.1} parent=1 // pred_check_branch
      %64 = sbr.rel (0) target = $region21
    $region20: #{estimator1d_forward.1} parent=1 // pred_region
      %66 = vsyncadd [#allocation8], 0
      %s68 = sshll.u32 %s4, 4
      %s69 = int_to_ptr.hbm [resolvable:$true] %s68
      %s70 = sshll.u32 [#allocation9], 4
      %s71 = int_to_ptr.vmem [resolvable:$true] %s70
      %73 = dma.hbm_to_vmem [thread:$0]  %s69, 256, %s71, [#allocation8]
    $region21: #{estimator1d_forward.1} parent=1 // pred_fallthru
      _
    // Predicated region
    $region22: #{estimator1d_forward.1} parent=1 // pred_check
      _
    $region23: #{estimator1d_forward.1} parent=1 // pred_check_branch
      %75 = sbr.rel (0) target = $region25
    $region24: #{estimator1d_forward.1} parent=1 // pred_region
      %77 = dma.done [#allocation3], 32
    $region25: #{estimator1d_forward.1} parent=1 // pred_fallthru
      _
    // Predicated region
    $region26: #{estimator1d_forward.1} parent=1 // pred_check
      _
    $region27: #{estimator1d_forward.1} parent=1 // pred_check_branch
      %79 = sbr.rel (0) target = $region29
    $region28: #{estimator1d_forward.1} parent=1 // pred_region
      %81 = dma.done [#allocation5], 1024
    $region29: #{estimator1d_forward.1} parent=1 // pred_fallthru
      _
    // Predicated region
    $region30: #{estimator1d_forward.1} parent=1 // pred_check
      _
    $region31: #{estimator1d_forward.1} parent=1 // pred_check_branch
      %83 = sbr.rel (0) target = $region33
    $region32: #{estimator1d_forward.1} parent=1 // pred_region
      %85 = dma.done [#allocation5], 32768
    $region33: #{estimator1d_forward.1} parent=1 // pred_fallthru
      _
    // Predicated region
    $region34: #{estimator1d_forward.1} parent=1 // pred_check
      _
    $region35: #{estimator1d_forward.1} parent=1 // pred_check_branch
      %87 = sbr.rel (0) target = $region37
    $region36: #{estimator1d_forward.1} parent=1 // pred_region
      %89 = dma.done [#allocation8], 8192
    $region37: #{estimator1d_forward.1} parent=1 // pred_fallthru
      _
    // Predicated region
    $region38: #{estimator1d_forward.1} parent=1 // pred_check
      _
    $region39: #{estimator1d_forward.1} parent=1 // pred_check_branch
      %91 = sbr.rel (0) target = $region41
    $region40: #{estimator1d_forward.1} parent=1 // pred_region
      %93 = dma.done [#allocation8], 256
    $region41: #{estimator1d_forward.1} parent=1 // pred_fallthru
      _
    %v94 = vld [vmem:[#allocation9] sm:$0x77]
    %v95 = vld [vmem:[#allocation9 + $0x8] sm:$0x77]
    %v96 = vld [vmem:[#allocation2] sm:$0x3]
    %v97 = vld [vmem:[#allocation4] sm:$0xff]
    %v98 = vld [vmem:[#allocation4 + $0x8] sm:$0xff]
    %v99 = vld [vmem:[#allocation4 + $0x10] sm:$0xff]
    %v100 = vld [vmem:[#allocation4 + $0x18] sm:$0xff]
    %v101 = vld [vmem:[#allocation4 + $0x20] sm:$0xff]
    %v102 = vld [vmem:[#allocation4 + $0x28] sm:$0xff]
    %v103 = vld [vmem:[#allocation4 + $0x30] sm:$0xff]
    %v104 = vld [vmem:[#allocation4 + $0x38] sm:$0xff]
    %v107 = vperm.slane %v94, 0
    %v108 = vperm.slane %v94, 4
    %v109 = vperm.slane %v95, 0
    %v110 = vperm.slane %v95, 4
    %v115 = vperm.slane %v107, 0
    %v116 = vperm.slane %v108, 0
    %v117 = vperm.slane %v109, 0
    %v118 = vperm.slane %v110, 0
    %vm119 = vcmask 130048
    %v121 = vsel %vm119, %v96, 0
    %123 = vmatpush.msra.mxu0 0.0
    %124 = vmatpush.msra.mxu0 0.0
    %125 = vmatpush.msra.mxu0 0.0
    %126 = vmatpush.msra.mxu0 0.0
    %127 = vmatpush.msra.mxu0 0.0
    %128 = vmatpush.msra.mxu0 0.0
    %129 = vmatpush.msra.mxu0 0.0
    %130 = vmatpush.msra.mxu0 0.0
    %131 = vmatpush.msra.mxu0 0.0
    %132 = vmatpush.msra.mxu0 0.0
    %133 = vmatpush.msra.mxu0 0.0
    %134 = vmatpush.msra.mxu0 0.0
    %135 = vmatpush.msra.mxu0 0.0
    %136 = vmatpush.msra.mxu0 0.0
    %137 = vmatpush.msra.mxu0 %v101
    %138 = vmatpush.msra.mxu0 %v97
    %139 = vmatmul.f32.gmra.mxu0 %v121
    %v140 = vpop.f32.mrf.mxu0
    %v141 = vadd.f32 %v115, %v140
    %142 = vdwg.mxu0
    %143 = vmatpush.msra.mxu0 0.0
    %144 = vmatpush.msra.mxu0 0.0
    %145 = vmatpush.msra.mxu0 0.0
    %146 = vmatpush.msra.mxu0 0.0
    %147 = vmatpush.msra.mxu0 0.0
    %148 = vmatpush.msra.mxu0 0.0
    %149 = vmatpush.msra.mxu0 0.0
    %150 = vmatpush.msra.mxu0 0.0
    %151 = vmatpush.msra.mxu0 0.0
    %152 = vmatpush.msra.mxu0 0.0
    %153 = vmatpush.msra.mxu0 0.0
    %154 = vmatpush.msra.mxu0 0.0
    %155 = vmatpush.msra.mxu0 0.0
    %156 = vmatpush.msra.mxu0 0.0
    %157 = vmatpush.msra.mxu0 %v102
    %158 = vmatpush.msra.mxu0 %v98
    %159 = vmatmul.f32.gmra.mxu0 %v121
    %v160 = vpop.f32.mrf.mxu0
    %v161 = vadd.f32 %v116, %v160
    %162 = vdwg.mxu0
    %163 = vmatpush.msra.mxu0 0.0
    %164 = vmatpush.msra.mxu0 0.0
    %165 = vmatpush.msra.mxu0 0.0
    %166 = vmatpush.msra.mxu0 0.0
    %167 = vmatpush.msra.mxu0 0.0
    %168 = vmatpush.msra.mxu0 0.0
    %169 = vmatpush.msra.mxu0 0.0
    %170 = vmatpush.msra.mxu0 0.0
    %171 = vmatpush.msra.mxu0 0.0
    %172 = vmatpush.msra.mxu0 0.0
    %173 = vmatpush.msra.mxu0 0.0
    %174 = vmatpush.msra.mxu0 0.0
    %175 = vmatpush.msra.mxu0 0.0
    %176 = vmatpush.msra.mxu0 0.0
    %177 = vmatpush.msra.mxu0 %v103
    %178 = vmatpush.msra.mxu0 %v99
    %179 = vmatmul.f32.gmra.mxu0 %v121
    %v180 = vpop.f32.mrf.mxu0
    %v181 = vadd.f32 %v117, %v180
    %182 = vdwg.mxu0
    %183 = vmatpush.msra.mxu0 0.0
    %184 = vmatpush.msra.mxu0 0.0
    %185 = vmatpush.msra.mxu0 0.0
    %186 = vmatpush.msra.mxu0 0.0
    %187 = vmatpush.msra.mxu0 0.0
    %188 = vmatpush.msra.mxu0 0.0
    %189 = vmatpush.msra.mxu0 0.0
    %190 = vmatpush.msra.mxu0 0.0
    %191 = vmatpush.msra.mxu0 0.0
    %192 = vmatpush.msra.mxu0 0.0
    %193 = vmatpush.msra.mxu0 0.0
    %194 = vmatpush.msra.mxu0 0.0
    %195 = vmatpush.msra.mxu0 0.0
    %196 = vmatpush.msra.mxu0 0.0
    %197 = vmatpush.msra.mxu0 %v104
    %198 = vmatpush.msra.mxu0 %v100
    %199 = vmatmul.f32.gmra.mxu0 %v121
    %v200 = vpop.f32.mrf.mxu0
    %v201 = vadd.f32 %v118, %v200
    %202 = vdwg.mxu0
    %v203 = vmul.f32 %v141, 0.01
    %v204 = vmul.f32 %v161, 0.01
    %v205 = vmul.f32 %v181, 0.01
    %v206 = vmul.f32 %v201, 0.01
    %v207 = vmax.f32 %v141, %v203
    %v208 = vmax.f32 %v161, %v204
    %v209 = vmax.f32 %v181, %v205
    %v210 = vmax.f32 %v201, %v206
    %v211 = vld [vmem:[#allocation6] sm:$0xff]
    %v212 = vld [vmem:[#allocation6 + $0x8] sm:$0xff]
    %v213 = vld [vmem:[#allocation6 + $0x10] sm:$0xff]
    %v214 = vld [vmem:[#allocation6 + $0x18] sm:$0xff]
    %v215 = vld [vmem:[#allocation6 + $0x20] sm:$0xff]
    %v216 = vld [vmem:[#allocation6 + $0x28] sm:$0xff]
    %v217 = vld [vmem:[#allocation6 + $0x30] sm:$0xff]
    %v218 = vld [vmem:[#allocation6 + $0x38] sm:$0xff]
    %v219 = vld [vmem:[#allocation6 + $0x40] sm:$0xff]
    %v220 = vld [vmem:[#allocation6 + $0x48] sm:$0xff]
    %v221 = vld [vmem:[#allocation6 + $0x50] sm:$0xff]
    %v222 = vld [vmem:[#allocation6 + $0x58] sm:$0xff]
    %v223 = vld [vmem:[#allocation6 + $0x60] sm:$0xff]
    %v224 = vld [vmem:[#allocation6 + $0x68] sm:$0xff]
    %v225 = vld [vmem:[#allocation6 + $0x70] sm:$0xff]
    %v226 = vld [vmem:[#allocation6 + $0x78] sm:$0xff]
    %v227 = vld [vmem:[#allocation6 + $0x80] sm:$0xff]
    %v228 = vld [vmem:[#allocation6 + $0x88] sm:$0xff]
    %v229 = vld [vmem:[#allocation6 + $0x90] sm:$0xff]
    %v230 = vld [vmem:[#allocation6 + $0x98] sm:$0xff]
    %v231 = vld [vmem:[#allocation6 + $0xa0] sm:$0xff]
    %v232 = vld [vmem:[#allocation6 + $0xa8] sm:$0xff]
    %v233 = vld [vmem:[#allocation6 + $0xb0] sm:$0xff]
    %v234 = vld [vmem:[#allocation6 + $0xb8] sm:$0xff]
    %v235 = vld [vmem:[#allocation6 + $0xc0] sm:$0xff]
    %v236 = vld [vmem:[#allocation6 + $0xc8] sm:$0xff]
    %v237 = vld [vmem:[#allocation6 + $0xd0] sm:$0xff]
    %v238 = vld [vmem:[#allocation6 + $0xd8] sm:$0xff]
    %v239 = vld [vmem:[#allocation6 + $0xe0] sm:$0xff]
    %v240 = vld [vmem:[#allocation6 + $0xe8] sm:$0xff]
    %v241 = vld [vmem:[#allocation6 + $0xf0] sm:$0xff]
    %v242 = vld [vmem:[#allocation6 + $0xf8] sm:$0xff]
    %v243 = vld [vmem:[#allocation6 + $0x100] sm:$0xff]
    %v244 = vld [vmem:[#allocation6 + $0x108] sm:$0xff]
    %v245 = vld [vmem:[#allocation6 + $0x110] sm:$0xff]
    %v246 = vld [vmem:[#allocation6 + $0x118] sm:$0xff]
    %v247 = vld [vmem:[#allocation6 + $0x120] sm:$0xff]
    %v248 = vld [vmem:[#allocation6 + $0x128] sm:$0xff]
    %v249 = vld [vmem:[#allocation6 + $0x130] sm:$0xff]
    %v250 = vld [vmem:[#allocation6 + $0x138] sm:$0xff]
    %v251 = vld [vmem:[#allocation6 + $0x140] sm:$0xff]
    %v252 = vld [vmem:[#allocation6 + $0x148] sm:$0xff]
    %v253 = vld [vmem:[#allocation6 + $0x150] sm:$0xff]
    %v254 = vld [vmem:[#allocation6 + $0x158] sm:$0xff]
    %v255 = vld [vmem:[#allocation6 + $0x160] sm:$0xff]
    %v256 = vld [vmem:[#allocation6 + $0x168] sm:$0xff]
    %v257 = vld [vmem:[#allocation6 + $0x170] sm:$0xff]
    %v258 = vld [vmem:[#allocation6 + $0x178] sm:$0xff]
    %v259 = vld [vmem:[#allocation6 + $0x180] sm:$0xff]
    %v260 = vld [vmem:[#allocation6 + $0x188] sm:$0xff]
    %v261 = vld [vmem:[#allocation6 + $0x190] sm:$0xff]
    %v262 = vld [vmem:[#allocation6 + $0x198] sm:$0xff]
    %v263 = vld [vmem:[#allocation6 + $0x1a0] sm:$0xff]
    %v264 = vld [vmem:[#allocation6 + $0x1a8] sm:$0xff]
    %v265 = vld [vmem:[#allocation6 + $0x1b0] sm:$0xff]
    %v266 = vld [vmem:[#allocation6 + $0x1b8] sm:$0xff]
    %v267 = vld [vmem:[#allocation6 + $0x1c0] sm:$0xff]
    %v268 = vld [vmem:[#allocation6 + $0x1c8] sm:$0xff]
    %v269 = vld [vmem:[#allocation6 + $0x1d0] sm:$0xff]
    %v270 = vld [vmem:[#allocation6 + $0x1d8] sm:$0xff]
    %v271 = vld [vmem:[#allocation6 + $0x1e0] sm:$0xff]
    %v272 = vld [vmem:[#allocation6 + $0x1e8] sm:$0xff]
    %v273 = vld [vmem:[#allocation6 + $0x1f0] sm:$0xff]
    %v274 = vld [vmem:[#allocation6 + $0x1f8] sm:$0xff]
    %v275 = vld [vmem:[#allocation6 + $0x200] sm:$0xff]
    %v276 = vld [vmem:[#allocation6 + $0x208] sm:$0xff]
    %v277 = vld [vmem:[#allocation6 + $0x210] sm:$0xff]
    %v278 = vld [vmem:[#allocation6 + $0x218] sm:$0xff]
    %v279 = vld [vmem:[#allocation6 + $0x220] sm:$0xff]
    %v280 = vld [vmem:[#allocation6 + $0x228] sm:$0xff]
    %v281 = vld [vmem:[#allocation6 + $0x230] sm:$0xff]
    %v282 = vld [vmem:[#allocation6 + $0x238] sm:$0xff]
    %v283 = vld [vmem:[#allocation6 + $0x240] sm:$0xff]
    %v284 = vld [vmem:[#allocation6 + $0x248] sm:$0xff]
    %v285 = vld [vmem:[#allocation6 + $0x250] sm:$0xff]
    %v286 = vld [vmem:[#allocation6 + $0x258] sm:$0xff]
    %v287 = vld [vmem:[#allocation6 + $0x260] sm:$0xff]
    %v288 = vld [vmem:[#allocation6 + $0x268] sm:$0xff]
    %v289 = vld [vmem:[#allocation6 + $0x270] sm:$0xff]
    %v290 = vld [vmem:[#allocation6 + $0x278] sm:$0xff]
    %v291 = vld [vmem:[#allocation6 + $0x280] sm:$0xff]
    %v292 = vld [vmem:[#allocation6 + $0x288] sm:$0xff]
    %v293 = vld [vmem:[#allocation6 + $0x290] sm:$0xff]
    %v294 = vld [vmem:[#allocation6 + $0x298] sm:$0xff]
    %v295 = vld [vmem:[#allocation6 + $0x2a0] sm:$0xff]
    %v296 = vld [vmem:[#allocation6 + $0x2a8] sm:$0xff]
    %v297 = vld [vmem:[#allocation6 + $0x2b0] sm:$0xff]
    %v298 = vld [vmem:[#allocation6 + $0x2b8] sm:$0xff]
    %v299 = vld [vmem:[#allocation6 + $0x2c0] sm:$0xff]
    %v300 = vld [vmem:[#allocation6 + $0x2c8] sm:$0xff]
    %v301 = vld [vmem:[#allocation6 + $0x2d0] sm:$0xff]
    %v302 = vld [vmem:[#allocation6 + $0x2d8] sm:$0xff]
    %v303 = vld [vmem:[#allocation6 + $0x2e0] sm:$0xff]
    %v304 = vld [vmem:[#allocation6 + $0x2e8] sm:$0xff]
    %v305 = vld [vmem:[#allocation6 + $0x2f0] sm:$0xff]
    %v306 = vld [vmem:[#allocation6 + $0x2f8] sm:$0xff]
    %v307 = vld [vmem:[#allocation6 + $0x300] sm:$0xff]
    %v308 = vld [vmem:[#allocation6 + $0x308] sm:$0xff]
    %v309 = vld [vmem:[#allocation6 + $0x310] sm:$0xff]
    %v310 = vld [vmem:[#allocation6 + $0x318] sm:$0xff]
    %v311 = vld [vmem:[#allocation6 + $0x320] sm:$0xff]
    %v312 = vld [vmem:[#allocation6 + $0x328] sm:$0xff]
    %v313 = vld [vmem:[#allocation6 + $0x330] sm:$0xff]
    %v314 = vld [vmem:[#allocation6 + $0x338] sm:$0xff]
    %v315 = vld [vmem:[#allocation6 + $0x340] sm:$0xff]
    %v316 = vld [vmem:[#allocation6 + $0x348] sm:$0xff]
    %v317 = vld [vmem:[#allocation6 + $0x350] sm:$0xff]
    %v318 = vld [vmem:[#allocation6 + $0x358] sm:$0xff]
    %v319 = vld [vmem:[#allocation6 + $0x360] sm:$0xff]
    %v320 = vld [vmem:[#allocation6 + $0x368] sm:$0xff]
    %v321 = vld [vmem:[#allocation6 + $0x370] sm:$0xff]
    %v322 = vld [vmem:[#allocation6 + $0x378] sm:$0xff]
    %v323 = vld [vmem:[#allocation6 + $0x380] sm:$0xff]
    %v324 = vld [vmem:[#allocation6 + $0x388] sm:$0xff]
    %v325 = vld [vmem:[#allocation6 + $0x390] sm:$0xff]
    %v326 = vld [vmem:[#allocation6 + $0x398] sm:$0xff]
    %v327 = vld [vmem:[#allocation6 + $0x3a0] sm:$0xff]
    %v328 = vld [vmem:[#allocation6 + $0x3a8] sm:$0xff]
    %v329 = vld [vmem:[#allocation6 + $0x3b0] sm:$0xff]
    %v330 = vld [vmem:[#allocation6 + $0x3b8] sm:$0xff]
    %v331 = vld [vmem:[#allocation6 + $0x3c0] sm:$0xff]
    %v332 = vld [vmem:[#allocation6 + $0x3c8] sm:$0xff]
    %v333 = vld [vmem:[#allocation6 + $0x3d0] sm:$0xff]
    %v334 = vld [vmem:[#allocation6 + $0x3d8] sm:$0xff]
    %v335 = vld [vmem:[#allocation6 + $0x3e0] sm:$0xff]
    %v336 = vld [vmem:[#allocation6 + $0x3e8] sm:$0xff]
    %v337 = vld [vmem:[#allocation6 + $0x3f0] sm:$0xff]
    %v338 = vld [vmem:[#allocation6 + $0x3f8] sm:$0xff]
    %v339 = vld [vmem:[#allocation6 + $0x400] sm:$0xff]
    %v340 = vld [vmem:[#allocation6 + $0x408] sm:$0xff]
    %v341 = vld [vmem:[#allocation6 + $0x410] sm:$0xff]
    %v342 = vld [vmem:[#allocation6 + $0x418] sm:$0xff]
    %v343 = vld [vmem:[#allocation6 + $0x420] sm:$0xff]
    %v344 = vld [vmem:[#allocation6 + $0x428] sm:$0xff]
    %v345 = vld [vmem:[#allocation6 + $0x430] sm:$0xff]
    %v346 = vld [vmem:[#allocation6 + $0x438] sm:$0xff]
    %v347 = vld [vmem:[#allocation6 + $0x440] sm:$0xff]
    %v348 = vld [vmem:[#allocation6 + $0x448] sm:$0xff]
    %v349 = vld [vmem:[#allocation6 + $0x450] sm:$0xff]
    %v350 = vld [vmem:[#allocation6 + $0x458] sm:$0xff]
    %v351 = vld [vmem:[#allocation6 + $0x460] sm:$0xff]
    %v352 = vld [vmem:[#allocation6 + $0x468] sm:$0xff]
    %v353 = vld [vmem:[#allocation6 + $0x470] sm:$0xff]
    %v354 = vld [vmem:[#allocation6 + $0x478] sm:$0xff]
    %v355 = vld [vmem:[#allocation6 + $0x480] sm:$0xff]
    %v356 = vld [vmem:[#allocation6 + $0x488] sm:$0xff]
    %v357 = vld [vmem:[#allocation6 + $0x490] sm:$0xff]
    %v358 = vld [vmem:[#allocation6 + $0x498] sm:$0xff]
    %v359 = vld [vmem:[#allocation6 + $0x4a0] sm:$0xff]
    %v360 = vld [vmem:[#allocation6 + $0x4a8] sm:$0xff]
    %v361 = vld [vmem:[#allocation6 + $0x4b0] sm:$0xff]
    %v362 = vld [vmem:[#allocation6 + $0x4b8] sm:$0xff]
    %v363 = vld [vmem:[#allocation6 + $0x4c0] sm:$0xff]
    %v364 = vld [vmem:[#allocation6 + $0x4c8] sm:$0xff]
    %v365 = vld [vmem:[#allocation6 + $0x4d0] sm:$0xff]
    %v366 = vld [vmem:[#allocation6 + $0x4d8] sm:$0xff]
    %v367 = vld [vmem:[#allocation6 + $0x4e0] sm:$0xff]
    %v368 = vld [vmem:[#allocation6 + $0x4e8] sm:$0xff]
    %v369 = vld [vmem:[#allocation6 + $0x4f0] sm:$0xff]
    %v370 = vld [vmem:[#allocation6 + $0x4f8] sm:$0xff]
    %v371 = vld [vmem:[#allocation6 + $0x500] sm:$0xff]
    %v372 = vld [vmem:[#allocation6 + $0x508] sm:$0xff]
    %v373 = vld [vmem:[#allocation6 + $0x510] sm:$0xff]
    %v374 = vld [vmem:[#allocation6 + $0x518] sm:$0xff]
    %v375 = vld [vmem:[#allocation6 + $0x520] sm:$0xff]
    %v376 = vld [vmem:[#allocation6 + $0x528] sm:$0xff]
    %v377 = vld [vmem:[#allocation6 + $0x530] sm:$0xff]
    %v378 = vld [vmem:[#allocation6 + $0x538] sm:$0xff]
    %v379 = vld [vmem:[#allocation6 + $0x540] sm:$0xff]
    %v380 = vld [vmem:[#allocation6 + $0x548] sm:$0xff]
    %v381 = vld [vmem:[#allocation6 + $0x550] sm:$0xff]
    %v382 = vld [vmem:[#allocation6 + $0x558] sm:$0xff]
    %v383 = vld [vmem:[#allocation6 + $0x560] sm:$0xff]
    %v384 = vld [vmem:[#allocation6 + $0x568] sm:$0xff]
    %v385 = vld [vmem:[#allocation6 + $0x570] sm:$0xff]
    %v386 = vld [vmem:[#allocation6 + $0x578] sm:$0xff]
    %v387 = vld [vmem:[#allocation6 + $0x580] sm:$0xff]
    %v388 = vld [vmem:[#allocation6 + $0x588] sm:$0xff]
    %v389 = vld [vmem:[#allocation6 + $0x590] sm:$0xff]
    %v390 = vld [vmem:[#allocation6 + $0x598] sm:$0xff]
    %v391 = vld [vmem:[#allocation6 + $0x5a0] sm:$0xff]
    %v392 = vld [vmem:[#allocation6 + $0x5a8] sm:$0xff]
    %v393 = vld [vmem:[#allocation6 + $0x5b0] sm:$0xff]
    %v394 = vld [vmem:[#allocation6 + $0x5b8] sm:$0xff]
    %v395 = vld [vmem:[#allocation6 + $0x5c0] sm:$0xff]
    %v396 = vld [vmem:[#allocation6 + $0x5c8] sm:$0xff]
    %v397 = vld [vmem:[#allocation6 + $0x5d0] sm:$0xff]
    %v398 = vld [vmem:[#allocation6 + $0x5d8] sm:$0xff]
    %v399 = vld [vmem:[#allocation6 + $0x5e0] sm:$0xff]
    %v400 = vld [vmem:[#allocation6 + $0x5e8] sm:$0xff]
    %v401 = vld [vmem:[#allocation6 + $0x5f0] sm:$0xff]
    %v402 = vld [vmem:[#allocation6 + $0x5f8] sm:$0xff]
    %v403 = vld [vmem:[#allocation6 + $0x600] sm:$0xff]
    %v404 = vld [vmem:[#allocation6 + $0x608] sm:$0xff]
    %v405 = vld [vmem:[#allocation6 + $0x610] sm:$0xff]
    %v406 = vld [vmem:[#allocation6 + $0x618] sm:$0xff]
    %v407 = vld [vmem:[#allocation6 + $0x620] sm:$0xff]
    %v408 = vld [vmem:[#allocation6 + $0x628] sm:$0xff]
    %v409 = vld [vmem:[#allocation6 + $0x630] sm:$0xff]
    %v410 = vld [vmem:[#allocation6 + $0x638] sm:$0xff]
    %v411 = vld [vmem:[#allocation6 + $0x640] sm:$0xff]
    %v412 = vld [vmem:[#allocation6 + $0x648] sm:$0xff]
    %v413 = vld [vmem:[#allocation6 + $0x650] sm:$0xff]
    %v414 = vld [vmem:[#allocation6 + $0x658] sm:$0xff]
    %v415 = vld [vmem:[#allocation6 + $0x660] sm:$0xff]
    %v416 = vld [vmem:[#allocation6 + $0x668] sm:$0xff]
    %v417 = vld [vmem:[#allocation6 + $0x670] sm:$0xff]
    %v418 = vld [vmem:[#allocation6 + $0x678] sm:$0xff]
    %v419 = vld [vmem:[#allocation6 + $0x680] sm:$0xff]
    %v420 = vld [vmem:[#allocation6 + $0x688] sm:$0xff]
    %v421 = vld [vmem:[#allocation6 + $0x690] sm:$0xff]
    %v422 = vld [vmem:[#allocation6 + $0x698] sm:$0xff]
    %v423 = vld [vmem:[#allocation6 + $0x6a0] sm:$0xff]
    %v424 = vld [vmem:[#allocation6 + $0x6a8] sm:$0xff]
    %v425 = vld [vmem:[#allocation6 + $0x6b0] sm:$0xff]
    %v426 = vld [vmem:[#allocation6 + $0x6b8] sm:$0xff]
    %v427 = vld [vmem:[#allocation6 + $0x6c0] sm:$0xff]
    %v428 = vld [vmem:[#allocation6 + $0x6c8] sm:$0xff]
    %v429 = vld [vmem:[#allocation6 + $0x6d0] sm:$0xff]
    %v430 = vld [vmem:[#allocation6 + $0x6d8] sm:$0xff]
    %v431 = vld [vmem:[#allocation6 + $0x6e0] sm:$0xff]
    %v432 = vld [vmem:[#allocation6 + $0x6e8] sm:$0xff]
    %v433 = vld [vmem:[#allocation6 + $0x6f0] sm:$0xff]
    %v434 = vld [vmem:[#allocation6 + $0x6f8] sm:$0xff]
    %v435 = vld [vmem:[#allocation6 + $0x700] sm:$0xff]
    %v436 = vld [vmem:[#allocation6 + $0x708] sm:$0xff]
    %v437 = vld [vmem:[#allocation6 + $0x710] sm:$0xff]
    %v438 = vld [vmem:[#allocation6 + $0x718] sm:$0xff]
    %v439 = vld [vmem:[#allocation6 + $0x720] sm:$0xff]
    %v440 = vld [vmem:[#allocation6 + $0x728] sm:$0xff]
    %v441 = vld [vmem:[#allocation6 + $0x730] sm:$0xff]
    %v442 = vld [vmem:[#allocation6 + $0x738] sm:$0xff]
    %v443 = vld [vmem:[#allocation6 + $0x740] sm:$0xff]
    %v444 = vld [vmem:[#allocation6 + $0x748] sm:$0xff]
    %v445 = vld [vmem:[#allocation6 + $0x750] sm:$0xff]
    %v446 = vld [vmem:[#allocation6 + $0x758] sm:$0xff]
    %v447 = vld [vmem:[#allocation6 + $0x760] sm:$0xff]
    %v448 = vld [vmem:[#allocation6 + $0x768] sm:$0xff]
    %v449 = vld [vmem:[#allocation6 + $0x770] sm:$0xff]
    %v450 = vld [vmem:[#allocation6 + $0x778] sm:$0xff]
    %v451 = vld [vmem:[#allocation6 + $0x780] sm:$0xff]
    %v452 = vld [vmem:[#allocation6 + $0x788] sm:$0xff]
    %v453 = vld [vmem:[#allocation6 + $0x790] sm:$0xff]
    %v454 = vld [vmem:[#allocation6 + $0x798] sm:$0xff]
    %v455 = vld [vmem:[#allocation6 + $0x7a0] sm:$0xff]
    %v456 = vld [vmem:[#allocation6 + $0x7a8] sm:$0xff]
    %v457 = vld [vmem:[#allocation6 + $0x7b0] sm:$0xff]
    %v458 = vld [vmem:[#allocation6 + $0x7b8] sm:$0xff]
    %v459 = vld [vmem:[#allocation6 + $0x7c0] sm:$0xff]
    %v460 = vld [vmem:[#allocation6 + $0x7c8] sm:$0xff]
    %v461 = vld [vmem:[#allocation6 + $0x7d0] sm:$0xff]
    %v462 = vld [vmem:[#allocation6 + $0x7d8] sm:$0xff]
    %v463 = vld [vmem:[#allocation6 + $0x7e0] sm:$0xff]
    %v464 = vld [vmem:[#allocation6 + $0x7e8] sm:$0xff]
    %v465 = vld [vmem:[#allocation6 + $0x7f0] sm:$0xff]
    %v466 = vld [vmem:[#allocation6 + $0x7f8] sm:$0xff]
    %v467 = vperm.slane %v94, 1
    %v468 = vperm.slane %v94, 5
    %v469 = vperm.slane %v95, 1
    %v470 = vperm.slane %v95, 5
    %v475 = vperm.slane %v467, 1
    %v476 = vperm.slane %v468, 1
    %v477 = vperm.slane %v469, 1
    %v478 = vperm.slane %v470, 1
    %479 = vmatpush.msra.mxu0 %v271
    %480 = vmatpush.msra.mxu0 %v267
    %481 = vmatpush.msra.mxu0 %v263
    %482 = vmatpush.msra.mxu0 %v259
    %483 = vmatpush.msra.mxu0 %v255
    %484 = vmatpush.msra.mxu0 %v251
    %485 = vmatpush.msra.mxu0 %v247
    %486 = vmatpush.msra.mxu0 %v243
    %487 = vmatpush.msra.mxu0 %v239
    %488 = vmatpush.msra.mxu0 %v235
    %489 = vmatpush.msra.mxu0 %v231
    %490 = vmatpush.msra.mxu0 %v227
    %491 = vmatpush.msra.mxu0 %v223
    %492 = vmatpush.msra.mxu0 %v219
    %493 = vmatpush.msra.mxu0 %v215
    %494 = vmatpush.msra.mxu0 %v211
    %495 = vmatmul.f32.gmra.mxu0 %v207
    %v496 = vpop.f32.mrf.mxu0
    %v497 = vadd.f32 %v475, %v496
    %498 = vdwg.mxu0
    %499 = vmatpush.msra.mxu0 %v335
    %500 = vmatpush.msra.mxu0 %v331
    %501 = vmatpush.msra.mxu0 %v327
    %502 = vmatpush.msra.mxu0 %v323
    %503 = vmatpush.msra.mxu0 %v319
    %504 = vmatpush.msra.mxu0 %v315
    %505 = vmatpush.msra.mxu0 %v311
    %506 = vmatpush.msra.mxu0 %v307
    %507 = vmatpush.msra.mxu0 %v303
    %508 = vmatpush.msra.mxu0 %v299
    %509 = vmatpush.msra.mxu0 %v295
    %510 = vmatpush.msra.mxu0 %v291
    %511 = vmatpush.msra.mxu0 %v287
    %512 = vmatpush.msra.mxu0 %v283
    %513 = vmatpush.msra.mxu0 %v279
    %514 = vmatpush.msra.mxu0 %v275
    %515 = vmatmul.f32.gmra.mxu0 %v208
    %v516 = vpop.f32.mrf.mxu0
    %v517 = vadd.f32 %v497, %v516
    %518 = vdwg.mxu0
    %519 = vmatpush.msra.mxu0 %v399
    %520 = vmatpush.msra.mxu0 %v395
    %521 = vmatpush.msra.mxu0 %v391
    %522 = vmatpush.msra.mxu0 %v387
    %523 = vmatpush.msra.mxu0 %v383
    %524 = vmatpush.msra.mxu0 %v379
    %525 = vmatpush.msra.mxu0 %v375
    %526 = vmatpush.msra.mxu0 %v371
    %527 = vmatpush.msra.mxu0 %v367
    %528 = vmatpush.msra.mxu0 %v363
    %529 = vmatpush.msra.mxu0 %v359
    %530 = vmatpush.msra.mxu0 %v355
    %531 = vmatpush.msra.mxu0 %v351
    %532 = vmatpush.msra.mxu0 %v347
    %533 = vmatpush.msra.mxu0 %v343
    %534 = vmatpush.msra.mxu0 %v339
    %535 = vmatmul.f32.gmra.mxu0 %v209
    %v536 = vpop.f32.mrf.mxu0
    %v537 = vadd.f32 %v517, %v536
    %538 = vdwg.mxu0
    %539 = vmatpush.msra.mxu0 %v463
    %540 = vmatpush.msra.mxu0 %v459
    %541 = vmatpush.msra.mxu0 %v455
    %542 = vmatpush.msra.mxu0 %v451
    %543 = vmatpush.msra.mxu0 %v447
    %544 = vmatpush.msra.mxu0 %v443
    %545 = vmatpush.msra.mxu0 %v439
    %546 = vmatpush.msra.mxu0 %v435
    %547 = vmatpush.msra.mxu0 %v431
    %548 = vmatpush.msra.mxu0 %v427
    %549 = vmatpush.msra.mxu0 %v423
    %550 = vmatpush.msra.mxu0 %v419
    %551 = vmatpush.msra.mxu0 %v415
    %552 = vmatpush.msra.mxu0 %v411
    %553 = vmatpush.msra.mxu0 %v407
    %554 = vmatpush.msra.mxu0 %v403
    %555 = vmatmul.f32.gmra.mxu0 %v210
    %v556 = vpop.f32.mrf.mxu0
    %v557 = vadd.f32 %v537, %v556
    %558 = vdwg.mxu0
    %559 = vmatpush.msra.mxu0 %v272
    %560 = vmatpush.msra.mxu0 %v268
    %561 = vmatpush.msra.mxu0 %v264
    %562 = vmatpush.msra.mxu0 %v260
    %563 = vmatpush.msra.mxu0 %v256
    %564 = vmatpush.msra.mxu0 %v252
    %565 = vmatpush.msra.mxu0 %v248
    %566 = vmatpush.msra.mxu0 %v244
    %567 = vmatpush.msra.mxu0 %v240
    %568 = vmatpush.msra.mxu0 %v236
    %569 = vmatpush.msra.mxu0 %v232
    %570 = vmatpush.msra.mxu0 %v228
    %571 = vmatpush.msra.mxu0 %v224
    %572 = vmatpush.msra.mxu0 %v220
    %573 = vmatpush.msra.mxu0 %v216
    %574 = vmatpush.msra.mxu0 %v212
    %575 = vmatmul.f32.gmra.mxu0 %v207
    %v576 = vpop.f32.mrf.mxu0
    %v577 = vadd.f32 %v476, %v576
    %578 = vdwg.mxu0
    %579 = vmatpush.msra.mxu0 %v336
    %580 = vmatpush.msra.mxu0 %v332
    %581 = vmatpush.msra.mxu0 %v328
    %582 = vmatpush.msra.mxu0 %v324
    %583 = vmatpush.msra.mxu0 %v320
    %584 = vmatpush.msra.mxu0 %v316
    %585 = vmatpush.msra.mxu0 %v312
    %586 = vmatpush.msra.mxu0 %v308
    %587 = vmatpush.msra.mxu0 %v304
    %588 = vmatpush.msra.mxu0 %v300
    %589 = vmatpush.msra.mxu0 %v296
    %590 = vmatpush.msra.mxu0 %v292
    %591 = vmatpush.msra.mxu0 %v288
    %592 = vmatpush.msra.mxu0 %v284
    %593 = vmatpush.msra.mxu0 %v280
    %594 = vmatpush.msra.mxu0 %v276
    %595 = vmatmul.f32.gmra.mxu0 %v208
    %v596 = vpop.f32.mrf.mxu0
    %v597 = vadd.f32 %v577, %v596
    %598 = vdwg.mxu0
    %599 = vmatpush.msra.mxu0 %v400
    %600 = vmatpush.msra.mxu0 %v396
    %601 = vmatpush.msra.mxu0 %v392
    %602 = vmatpush.msra.mxu0 %v388
    %603 = vmatpush.msra.mxu0 %v384
    %604 = vmatpush.msra.mxu0 %v380
    %605 = vmatpush.msra.mxu0 %v376
    %606 = vmatpush.msra.mxu0 %v372
    %607 = vmatpush.msra.mxu0 %v368
    %608 = vmatpush.msra.mxu0 %v364
    %609 = vmatpush.msra.mxu0 %v360
    %610 = vmatpush.msra.mxu0 %v356
    %611 = vmatpush.msra.mxu0 %v352
    %612 = vmatpush.msra.mxu0 %v348
    %613 = vmatpush.msra.mxu0 %v344
    %614 = vmatpush.msra.mxu0 %v340
    %615 = vmatmul.f32.gmra.mxu0 %v209
    %v616 = vpop.f32.mrf.mxu0
    %v617 = vadd.f32 %v597, %v616
    %618 = vdwg.mxu0
    %619 = vmatpush.msra.mxu0 %v464
    %620 = vmatpush.msra.mxu0 %v460
    %621 = vmatpush.msra.mxu0 %v456
    %622 = vmatpush.msra.mxu0 %v452
    %623 = vmatpush.msra.mxu0 %v448
    %624 = vmatpush.msra.mxu0 %v444
    %625 = vmatpush.msra.mxu0 %v440
    %626 = vmatpush.msra.mxu0 %v436
    %627 = vmatpush.msra.mxu0 %v432
    %628 = vmatpush.msra.mxu0 %v428
    %629 = vmatpush.msra.mxu0 %v424
    %630 = vmatpush.msra.mxu0 %v420
    %631 = vmatpush.msra.mxu0 %v416
    %632 = vmatpush.msra.mxu0 %v412
    %633 = vmatpush.msra.mxu0 %v408
    %634 = vmatpush.msra.mxu0 %v404
    %635 = vmatmul.f32.gmra.mxu0 %v210
    %v636 = vpop.f32.mrf.mxu0
    %v637 = vadd.f32 %v617, %v636
    %638 = vdwg.mxu0
    %639 = vmatpush.msra.mxu0 %v273
    %640 = vmatpush.msra.mxu0 %v269
    %641 = vmatpush.msra.mxu0 %v265
    %642 = vmatpush.msra.mxu0 %v261
    %643 = vmatpush.msra.mxu0 %v257
    %644 = vmatpush.msra.mxu0 %v253
    %645 = vmatpush.msra.mxu0 %v249
    %646 = vmatpush.msra.mxu0 %v245
    %647 = vmatpush.msra.mxu0 %v241
    %648 = vmatpush.msra.mxu0 %v237
    %649 = vmatpush.msra.mxu0 %v233
    %650 = vmatpush.msra.mxu0 %v229
    %651 = vmatpush.msra.mxu0 %v225
    %652 = vmatpush.msra.mxu0 %v221
    %653 = vmatpush.msra.mxu0 %v217
    %654 = vmatpush.msra.mxu0 %v213
    %655 = vmatmul.f32.gmra.mxu0 %v207
    %v656 = vpop.f32.mrf.mxu0
    %v657 = vadd.f32 %v477, %v656
    %658 = vdwg.mxu0
    %659 = vmatpush.msra.mxu0 %v337
    %660 = vmatpush.msra.mxu0 %v333
    %661 = vmatpush.msra.mxu0 %v329
    %662 = vmatpush.msra.mxu0 %v325
    %663 = vmatpush.msra.mxu0 %v321
    %664 = vmatpush.msra.mxu0 %v317
    %665 = vmatpush.msra.mxu0 %v313
    %666 = vmatpush.msra.mxu0 %v309
    %667 = vmatpush.msra.mxu0 %v305
    %668 = vmatpush.msra.mxu0 %v301
    %669 = vmatpush.msra.mxu0 %v297
    %670 = vmatpush.msra.mxu0 %v293
    %671 = vmatpush.msra.mxu0 %v289
    %672 = vmatpush.msra.mxu0 %v285
    %673 = vmatpush.msra.mxu0 %v281
    %674 = vmatpush.msra.mxu0 %v277
    %675 = vmatmul.f32.gmra.mxu0 %v208
    %v676 = vpop.f32.mrf.mxu0
    %v677 = vadd.f32 %v657, %v676
    %678 = vdwg.mxu0
    %679 = vmatpush.msra.mxu0 %v401
    %680 = vmatpush.msra.mxu0 %v397
    %681 = vmatpush.msra.mxu0 %v393
    %682 = vmatpush.msra.mxu0 %v389
    %683 = vmatpush.msra.mxu0 %v385
    %684 = vmatpush.msra.mxu0 %v381
    %685 = vmatpush.msra.mxu0 %v377
    %686 = vmatpush.msra.mxu0 %v373
    %687 = vmatpush.msra.mxu0 %v369
    %688 = vmatpush.msra.mxu0 %v365
    %689 = vmatpush.msra.mxu0 %v361
    %690 = vmatpush.msra.mxu0 %v357
    %691 = vmatpush.msra.mxu0 %v353
    %692 = vmatpush.msra.mxu0 %v349
    %693 = vmatpush.msra.mxu0 %v345
    %694 = vmatpush.msra.mxu0 %v341
    %695 = vmatmul.f32.gmra.mxu0 %v209
    %v696 = vpop.f32.mrf.mxu0
    %v697 = vadd.f32 %v677, %v696
    %698 = vdwg.mxu0
    %699 = vmatpush.msra.mxu0 %v465
    %700 = vmatpush.msra.mxu0 %v461
    %701 = vmatpush.msra.mxu0 %v457
    %702 = vmatpush.msra.mxu0 %v453
    %703 = vmatpush.msra.mxu0 %v449
    %704 = vmatpush.msra.mxu0 %v445
    %705 = vmatpush.msra.mxu0 %v441
    %706 = vmatpush.msra.mxu0 %v437
    %707 = vmatpush.msra.mxu0 %v433
    %708 = vmatpush.msra.mxu0 %v429
    %709 = vmatpush.msra.mxu0 %v425
    %710 = vmatpush.msra.mxu0 %v421
    %711 = vmatpush.msra.mxu0 %v417
    %712 = vmatpush.msra.mxu0 %v413
    %713 = vmatpush.msra.mxu0 %v409
    %714 = vmatpush.msra.mxu0 %v405
    %715 = vmatmul.f32.gmra.mxu0 %v210
    %v716 = vpop.f32.mrf.mxu0
    %v717 = vadd.f32 %v697, %v716
    %718 = vdwg.mxu0
    %719 = vmatpush.msra.mxu0 %v274
    %720 = vmatpush.msra.mxu0 %v270
    %721 = vmatpush.msra.mxu0 %v266
    %722 = vmatpush.msra.mxu0 %v262
    %723 = vmatpush.msra.mxu0 %v258
    %724 = vmatpush.msra.mxu0 %v254
    %725 = vmatpush.msra.mxu0 %v250
    %726 = vmatpush.msra.mxu0 %v246
    %727 = vmatpush.msra.mxu0 %v242
    %728 = vmatpush.msra.mxu0 %v238
    %729 = vmatpush.msra.mxu0 %v234
    %730 = vmatpush.msra.mxu0 %v230
    %731 = vmatpush.msra.mxu0 %v226
    %732 = vmatpush.msra.mxu0 %v222
    %733 = vmatpush.msra.mxu0 %v218
    %734 = vmatpush.msra.mxu0 %v214
    %735 = vmatmul.f32.gmra.mxu0 %v207
    %v736 = vpop.f32.mrf.mxu0
    %v737 = vadd.f32 %v478, %v736
    %738 = vdwg.mxu0
    %739 = vmatpush.msra.mxu0 %v338
    %740 = vmatpush.msra.mxu0 %v334
    %741 = vmatpush.msra.mxu0 %v330
    %742 = vmatpush.msra.mxu0 %v326
    %743 = vmatpush.msra.mxu0 %v322
    %744 = vmatpush.msra.mxu0 %v318
    %745 = vmatpush.msra.mxu0 %v314
    %746 = vmatpush.msra.mxu0 %v310
    %747 = vmatpush.msra.mxu0 %v306
    %748 = vmatpush.msra.mxu0 %v302
    %749 = vmatpush.msra.mxu0 %v298
    %750 = vmatpush.msra.mxu0 %v294
    %751 = vmatpush.msra.mxu0 %v290
    %752 = vmatpush.msra.mxu0 %v286
    %753 = vmatpush.msra.mxu0 %v282
    %754 = vmatpush.msra.mxu0 %v278
    %755 = vmatmul.f32.gmra.mxu0 %v208
    %v756 = vpop.f32.mrf.mxu0
    %v757 = vadd.f32 %v737, %v756
    %758 = vdwg.mxu0
    %759 = vmatpush.msra.mxu0 %v402
    %760 = vmatpush.msra.mxu0 %v398
    %761 = vmatpush.msra.mxu0 %v394
    %762 = vmatpush.msra.mxu0 %v390
    %763 = vmatpush.msra.mxu0 %v386
    %764 = vmatpush.msra.mxu0 %v382
    %765 = vmatpush.msra.mxu0 %v378
    %766 = vmatpush.msra.mxu0 %v374
    %767 = vmatpush.msra.mxu0 %v370
    %768 = vmatpush.msra.mxu0 %v366
    %769 = vmatpush.msra.mxu0 %v362
    %770 = vmatpush.msra.mxu0 %v358
    %771 = vmatpush.msra.mxu0 %v354
    %772 = vmatpush.msra.mxu0 %v350
    %773 = vmatpush.msra.mxu0 %v346
    %774 = vmatpush.msra.mxu0 %v342
    %775 = vmatmul.f32.gmra.mxu0 %v209
    %v776 = vpop.f32.mrf.mxu0
    %v777 = vadd.f32 %v757, %v776
    %778 = vdwg.mxu0
    %779 = vmatpush.msra.mxu0 %v466
    %780 = vmatpush.msra.mxu0 %v462
    %781 = vmatpush.msra.mxu0 %v458
    %782 = vmatpush.msra.mxu0 %v454
    %783 = vmatpush.msra.mxu0 %v450
    %784 = vmatpush.msra.mxu0 %v446
    %785 = vmatpush.msra.mxu0 %v442
    %786 = vmatpush.msra.mxu0 %v438
    %787 = vmatpush.msra.mxu0 %v434
    %788 = vmatpush.msra.mxu0 %v430
    %789 = vmatpush.msra.mxu0 %v426
    %790 = vmatpush.msra.mxu0 %v422
    %791 = vmatpush.msra.mxu0 %v418
    %792 = vmatpush.msra.mxu0 %v414
    %793 = vmatpush.msra.mxu0 %v410
    %794 = vmatpush.msra.mxu0 %v406
    %795 = vmatmul.f32.gmra.mxu0 %v210
    %v796 = vpop.f32.mrf.mxu0
    %v797 = vadd.f32 %v777, %v796
    %798 = vdwg.mxu0
    %v799 = vmul.f32 %v557, 0.01
    %v800 = vmul.f32 %v637, 0.01
    %v801 = vmul.f32 %v717, 0.01
    %v802 = vmul.f32 %v797, 0.01
    %v803 = vmax.f32 %v557, %v799
    %v804 = vmax.f32 %v637, %v800
    %v805 = vmax.f32 %v717, %v801
    %v806 = vmax.f32 %v797, %v802
    %v807 = vld [vmem:[#allocation7] sm:$0xff]
    %v808 = vld [vmem:[#allocation7 + $0x8] sm:$0xff]
    %v809 = vld [vmem:[#allocation7 + $0x10] sm:$0xff]
    %v810 = vld [vmem:[#allocation7 + $0x18] sm:$0xff]
    %v811 = vld [vmem:[#allocation7 + $0x20] sm:$0xff]
    %v812 = vld [vmem:[#allocation7 + $0x28] sm:$0xff]
    %v813 = vld [vmem:[#allocation7 + $0x30] sm:$0xff]
    %v814 = vld [vmem:[#allocation7 + $0x38] sm:$0xff]
    %v815 = vld [vmem:[#allocation7 + $0x40] sm:$0xff]
    %v816 = vld [vmem:[#allocation7 + $0x48] sm:$0xff]
    %v817 = vld [vmem:[#allocation7 + $0x50] sm:$0xff]
    %v818 = vld [vmem:[#allocation7 + $0x58] sm:$0xff]
    %v819 = vld [vmem:[#allocation7 + $0x60] sm:$0xff]
    %v820 = vld [vmem:[#allocation7 + $0x68] sm:$0xff]
    %v821 = vld [vmem:[#allocation7 + $0x70] sm:$0xff]
    %v822 = vld [vmem:[#allocation7 + $0x78] sm:$0xff]
    %v823 = vld [vmem:[#allocation7 + $0x80] sm:$0xff]
    %v824 = vld [vmem:[#allocation7 + $0x88] sm:$0xff]
    %v825 = vld [vmem:[#allocation7 + $0x90] sm:$0xff]
    %v826 = vld [vmem:[#allocation7 + $0x98] sm:$0xff]
    %v827 = vld [vmem:[#allocation7 + $0xa0] sm:$0xff]
    %v828 = vld [vmem:[#allocation7 + $0xa8] sm:$0xff]
    %v829 = vld [vmem:[#allocation7 + $0xb0] sm:$0xff]
    %v830 = vld [vmem:[#allocation7 + $0xb8] sm:$0xff]
    %v831 = vld [vmem:[#allocation7 + $0xc0] sm:$0xff]
    %v832 = vld [vmem:[#allocation7 + $0xc8] sm:$0xff]
    %v833 = vld [vmem:[#allocation7 + $0xd0] sm:$0xff]
    %v834 = vld [vmem:[#allocation7 + $0xd8] sm:$0xff]
    %v835 = vld [vmem:[#allocation7 + $0xe0] sm:$0xff]
    %v836 = vld [vmem:[#allocation7 + $0xe8] sm:$0xff]
    %v837 = vld [vmem:[#allocation7 + $0xf0] sm:$0xff]
    %v838 = vld [vmem:[#allocation7 + $0xf8] sm:$0xff]
    %v839 = vld [vmem:[#allocation7 + $0x100] sm:$0xff]
    %v840 = vld [vmem:[#allocation7 + $0x108] sm:$0xff]
    %v841 = vld [vmem:[#allocation7 + $0x110] sm:$0xff]
    %v842 = vld [vmem:[#allocation7 + $0x118] sm:$0xff]
    %v843 = vld [vmem:[#allocation7 + $0x120] sm:$0xff]
    %v844 = vld [vmem:[#allocation7 + $0x128] sm:$0xff]
    %v845 = vld [vmem:[#allocation7 + $0x130] sm:$0xff]
    %v846 = vld [vmem:[#allocation7 + $0x138] sm:$0xff]
    %v847 = vld [vmem:[#allocation7 + $0x140] sm:$0xff]
    %v848 = vld [vmem:[#allocation7 + $0x148] sm:$0xff]
    %v849 = vld [vmem:[#allocation7 + $0x150] sm:$0xff]
    %v850 = vld [vmem:[#allocation7 + $0x158] sm:$0xff]
    %v851 = vld [vmem:[#allocation7 + $0x160] sm:$0xff]
    %v852 = vld [vmem:[#allocation7 + $0x168] sm:$0xff]
    %v853 = vld [vmem:[#allocation7 + $0x170] sm:$0xff]
    %v854 = vld [vmem:[#allocation7 + $0x178] sm:$0xff]
    %v855 = vld [vmem:[#allocation7 + $0x180] sm:$0xff]
    %v856 = vld [vmem:[#allocation7 + $0x188] sm:$0xff]
    %v857 = vld [vmem:[#allocation7 + $0x190] sm:$0xff]
    %v858 = vld [vmem:[#allocation7 + $0x198] sm:$0xff]
    %v859 = vld [vmem:[#allocation7 + $0x1a0] sm:$0xff]
    %v860 = vld [vmem:[#allocation7 + $0x1a8] sm:$0xff]
    %v861 = vld [vmem:[#allocation7 + $0x1b0] sm:$0xff]
    %v862 = vld [vmem:[#allocation7 + $0x1b8] sm:$0xff]
    %v863 = vld [vmem:[#allocation7 + $0x1c0] sm:$0xff]
    %v864 = vld [vmem:[#allocation7 + $0x1c8] sm:$0xff]
    %v865 = vld [vmem:[#allocation7 + $0x1d0] sm:$0xff]
    %v866 = vld [vmem:[#allocation7 + $0x1d8] sm:$0xff]
    %v867 = vld [vmem:[#allocation7 + $0x1e0] sm:$0xff]
    %v868 = vld [vmem:[#allocation7 + $0x1e8] sm:$0xff]
    %v869 = vld [vmem:[#allocation7 + $0x1f0] sm:$0xff]
    %v870 = vld [vmem:[#allocation7 + $0x1f8] sm:$0xff]
    %v871 = vperm.slane %v94, 2
    %872 = vmatpush.msra.mxu0 %v822
    %873 = vmatpush.msra.mxu0 %v821
    %874 = vmatpush.msra.mxu0 %v820
    %875 = vmatpush.msra.mxu0 %v819
    %876 = vmatpush.msra.mxu0 %v818
    %877 = vmatpush.msra.mxu0 %v817
    %878 = vmatpush.msra.mxu0 %v816
    %879 = vmatpush.msra.mxu0 %v815
    %880 = vmatpush.msra.mxu0 %v814
    %881 = vmatpush.msra.mxu0 %v813
    %882 = vmatpush.msra.mxu0 %v812
    %883 = vmatpush.msra.mxu0 %v811
    %884 = vmatpush.msra.mxu0 %v810
    %885 = vmatpush.msra.mxu0 %v809
    %886 = vmatpush.msra.mxu0 %v808
    %887 = vmatpush.msra.mxu0 %v807
    %888 = vmatmul.f32.gmra.mxu0 %v803
    %v889 = vpop.f32.mrf.mxu0
    %v890 = vadd.f32 %v871, %v889
    %891 = vdwg.mxu0
    %892 = vmatpush.msra.mxu0 %v838
    %893 = vmatpush.msra.mxu0 %v837
    %894 = vmatpush.msra.mxu0 %v836
    %895 = vmatpush.msra.mxu0 %v835
    %896 = vmatpush.msra.mxu0 %v834
    %897 = vmatpush.msra.mxu0 %v833
    %898 = vmatpush.msra.mxu0 %v832
    %899 = vmatpush.msra.mxu0 %v831
    %900 = vmatpush.msra.mxu0 %v830
    %901 = vmatpush.msra.mxu0 %v829
    %902 = vmatpush.msra.mxu0 %v828
    %903 = vmatpush.msra.mxu0 %v827
    %904 = vmatpush.msra.mxu0 %v826
    %905 = vmatpush.msra.mxu0 %v825
    %906 = vmatpush.msra.mxu0 %v824
    %907 = vmatpush.msra.mxu0 %v823
    %908 = vmatmul.f32.gmra.mxu0 %v804
    %v909 = vpop.f32.mrf.mxu0
    %v910 = vadd.f32 %v890, %v909
    %911 = vdwg.mxu0
    %912 = vmatpush.msra.mxu0 %v854
    %913 = vmatpush.msra.mxu0 %v853
    %914 = vmatpush.msra.mxu0 %v852
    %915 = vmatpush.msra.mxu0 %v851
    %916 = vmatpush.msra.mxu0 %v850
    %917 = vmatpush.msra.mxu0 %v849
    %918 = vmatpush.msra.mxu0 %v848
    %919 = vmatpush.msra.mxu0 %v847
    %920 = vmatpush.msra.mxu0 %v846
    %921 = vmatpush.msra.mxu0 %v845
    %922 = vmatpush.msra.mxu0 %v844
    %923 = vmatpush.msra.mxu0 %v843
    %924 = vmatpush.msra.mxu0 %v842
    %925 = vmatpush.msra.mxu0 %v841
    %926 = vmatpush.msra.mxu0 %v840
    %927 = vmatpush.msra.mxu0 %v839
    %928 = vmatmul.f32.gmra.mxu0 %v805
    %v929 = vpop.f32.mrf.mxu0
    %v930 = vadd.f32 %v910, %v929
    %931 = vdwg.mxu0
    %932 = vmatpush.msra.mxu0 %v870
    %933 = vmatpush.msra.mxu0 %v869
    %934 = vmatpush.msra.mxu0 %v868
    %935 = vmatpush.msra.mxu0 %v867
    %936 = vmatpush.msra.mxu0 %v866
    %937 = vmatpush.msra.mxu0 %v865
    %938 = vmatpush.msra.mxu0 %v864
    %939 = vmatpush.msra.mxu0 %v863
    %940 = vmatpush.msra.mxu0 %v862
    %941 = vmatpush.msra.mxu0 %v861
    %942 = vmatpush.msra.mxu0 %v860
    %943 = vmatpush.msra.mxu0 %v859
    %944 = vmatpush.msra.mxu0 %v858
    %945 = vmatpush.msra.mxu0 %v857
    %946 = vmatpush.msra.mxu0 %v856
    %947 = vmatpush.msra.mxu0 %v855
    %948 = vmatmul.f32.gmra.mxu0 %v806
    %v949 = vpop.f32.mrf.mxu0
    %v950 = vadd.f32 %v930, %v949
    %951 = vdwg.mxu0
    %952 = vst [vmem:[%s5] sm:$0x3] %v950
    // Predicated region
    $region42: #{estimator1d_forward.1} parent=1 // pred_check
      _
    $region43: #{estimator1d_forward.1} parent=1 // pred_check_branch
      %954 = sbr.rel (0) target = $region45
    $region44: #{estimator1d_forward.1} parent=1 // pred_region
      _
    $region45: #{estimator1d_forward.1} parent=1 // pred_fallthru
      _
    // Predicated region
    $region46: #{estimator1d_forward.1} parent=1 // pred_check
      _
    $region47: #{estimator1d_forward.1} parent=1 // pred_check_branch
      %956 = sbr.rel (0) target = $region49
    $region48: #{estimator1d_forward.1} parent=1 // pred_region
      _
    $region49: #{estimator1d_forward.1} parent=1 // pred_fallthru
      _
    %957 = vsyncpa [#allocation3], 1
    %958 = vsyncpa [#allocation5], 1
    %959 = vsyncpa [#allocation8], 1

</llo_original>
